<compile_context>
chip_gen: v7x
topology: tpu7x:2x2x1
jax: 0.10.0
libtpu: 0.0.40
codegen_flags: <defaults>
</compile_context>

<pallas_src>
import jax
import jax.numpy as jnp
from jax.experimental import pallas as pl
from jax.experimental.pallas import tpu as pltpu

TAIL = 5  # the module returns predictions[-5:]


def lstm_kernel(x_ref, wih_ref, b_ref, whh_ref, wlin_ref, blin_ref, y_ref):
    """Fused forward: input projection + T-step LSTM recurrence + linear head.

    x_ref    : (T, in)    raw input sequence (in == 1 for this module)
    wih_ref  : (in, 4H)   input weights^T, g-gate columns pre-scaled x2
    b_ref    : (1, 4H)    b_ih + b_hh, g-gate columns pre-scaled x2
    whh_ref  : (H, 4H)    recurrent weights^T, g-gate columns pre-scaled x2
    wlin_ref : (H, out)   head weights^T
    blin_ref : (1, out)   head bias
    y_ref    : (tail,out) predictions[-tail:]
    """
    T = x_ref.shape[0]
    in_sz = x_ref.shape[1]
    H = whh_ref.shape[0]
    tail = y_ref.shape[0]

    # Non-recurrent input projection fused into the kernel (off the serial
    # chain).  input_size == 1 -> one broadcast VPU mul-add over a (T, 4H)
    # block; general input_size -> one small MXU matmul.
    if in_sz == 1:
        xproj = x_ref[...] * wih_ref[...] + b_ref[...]          # (T,1)*(1,4H)+(1,4H)
    else:
        xproj = (jnp.dot(x_ref[...], wih_ref[...],
                         preferred_element_type=jnp.float32) + b_ref[...])

    whh = whh_ref[...]           # (H, 4H) stays resident for the whole call

    h = jnp.zeros((1, H), jnp.float32)
    c = jnp.zeros((1, H), jnp.float32)

    hs = []
    for t in range(T):           # fully unrolled; T is small & static
        # Recurrent projection only: (1,H) @ (H,4H) -> (1,4H)
        gates = (jnp.dot(h, whh, preferred_element_type=jnp.float32)
                 + xproj[t:t + 1, :])

        # SINGLE transcendental pass over the dense 4H-lane gate vreg.
        # Gate order is (i, f, g, o); the g columns were pre-scaled by 2 in
        # the wrapper so tanh(g) == 2*sigmoid(2g) - 1.
        sg = jax.nn.sigmoid(gates)
        i_g = sg[:, 0:H]
        f_g = sg[:, H:2 * H]
        g_g = 2.0 * sg[:, 2 * H:3 * H] - 1.0
        o_g = sg[:, 3 * H:4 * H]

        c = f_g * c + i_g * g_g
        h = o_g * jnp.tanh(c)
        hs.append(h)

    # Head only on the rows the caller needs (y[-5:] fused into the kernel):
    # one (tail,H)@(H,out) matmul + one store.
    h_tail = jnp.concatenate(hs[T - tail:], axis=0)             # (tail, H)
    y_ref[...] = (jnp.dot(h_tail, wlin_ref[...],
                          preferred_element_type=jnp.float32)
                  + blin_ref[...])


def lstm_forward(input_seq, w_ih, w_hh, b_ih, b_hh, w_lin, b_lin):
    """Pallas implementation of LSTM.forward; returns predictions[-5:]."""
    hidden = w_hh.shape[1]
    out_size = w_lin.shape[0]
    seq_len = input_seq.shape[0]
    tail = min(TAIL, seq_len)

    x2 = input_seq.reshape(seq_len, -1).astype(jnp.float32)        # (T, in)
    in_size = x2.shape[1]

    wih_t = jnp.asarray(w_ih, jnp.float32).T                       # (in, 4H)
    whh_t = jnp.asarray(w_hh, jnp.float32).T                       # (H, 4H)
    b = (jnp.asarray(b_ih, jnp.float32)
         + jnp.asarray(b_hh, jnp.float32)).reshape(1, -1)          # (1, 4H)
    wlin_t = jnp.asarray(w_lin, jnp.float32).T                     # (H, out)
    blin = jnp.asarray(b_lin, jnp.float32).reshape(1, -1)          # (1, out)

    # Pre-scale the g-gate columns by 2 (free, host side) so the kernel needs
    # only ONE EUP pass per step: tanh(x) == 2*sigmoid(2x) - 1.
    gate_scale = jnp.ones((1, 4 * hidden), jnp.float32)
    gate_scale = gate_scale.at[:, 2 * hidden:3 * hidden].set(2.0)
    wih_t = wih_t * gate_scale
    whh_t = whh_t * gate_scale
    b = b * gate_scale

    # Advisory scheduling hint for XLA around this tiny custom call.
    flops = (2 * seq_len * hidden * 4 * hidden        # recurrent matmuls
             + 2 * seq_len * in_size * 4 * hidden     # fused input projection
             + 2 * tail * hidden * out_size           # head matmul
             + 10 * seq_len * hidden)                 # element-wise gate math
    bytes_accessed = 4 * (x2.size + wih_t.size + b.size + whh_t.size
                          + wlin_t.size + blin.size + tail * out_size)
    cost = pl.CostEstimate(flops=flops,
                           transcendentals=5 * seq_len * hidden,
                           bytes_accessed=bytes_accessed)

    vmem = pl.BlockSpec(memory_space=pltpu.MemorySpace.VMEM)   # whole-array VMEM residency
    y_tail = pl.pallas_call(
        lstm_kernel,
        out_shape=jax.ShapeDtypeStruct((tail, out_size), jnp.float32),
        in_specs=[vmem] * 6,
        out_specs=vmem,
        cost_estimate=cost,
    )(x2, wih_t, b, whh_t, wlin_t, blin)

    return y_tail


def lstm_reference(input_seq, w_ih, w_hh, b_ih, b_hh, w_lin, b_lin):
    """Pure-JAX reference of the same forward pass (for correctness check)."""
    hidden = w_hh.shape[1]
    x2 = input_seq.reshape(input_seq.shape[0], -1).astype(jnp.float32)

    def step(carry, x_t):
        h, c = carry
        gates = x_t @ w_ih.T + h @ w_hh.T + b_ih + b_hh
        i_g = jax.nn.sigmoid(gates[:, 0:hidden])
        f_g = jax.nn.sigmoid(gates[:, hidden:2 * hidden])
        g_g = jnp.tanh(gates[:, 2 * hidden:3 * hidden])
        o_g = jax.nn.sigmoid(gates[:, 3 * hidden:4 * hidden])
        c = f_g * c + i_g * g_g
        h = o_g * jnp.tanh(c)
        return (h, c), h

    h0 = jnp.zeros((1, hidden), jnp.float32)
    c0 = jnp.zeros((1, hidden), jnp.float32)
    _, hs = jax.lax.scan(step, (h0, c0), x2[:, None, :])
    hs = hs.reshape(x2.shape[0], hidden)
    preds = hs @ w_lin.T + b_lin
    return preds[-5:]


if __name__ == "__main__":
    # Small shapes consistent with the module: seq=8, input_size=1,
    # hidden_layer_size=32, output_size=1.
    seq_len, input_size, hidden, output_size = 8, 1, 32, 1

    key = jax.random.PRNGKey(0)
    k_x, k1, k2, k3, k4, k5, k6 = jax.random.split(key, 7)

    # Deterministic parameter init mimicking PyTorch's U(-1/sqrt(H), 1/sqrt(H)).
    bound = 1.0 / jnp.sqrt(jnp.float32(hidden))
    u = lambda k, shape: jax.random.uniform(k, shape, jnp.float32, -bound, bound)

    w_ih = u(k1, (4 * hidden, input_size))
    w_hh = u(k2, (4 * hidden, hidden))
    b_ih = u(k3, (4 * hidden,))
    b_hh = u(k4, (4 * hidden,))
    w_lin = u(k5, (output_size, hidden))
    b_lin = u(k6, (output_size,))

    input_seq = jax.random.normal(k_x, (seq_len,), jnp.float32)

    out = jax.jit(lstm_forward)(input_seq, w_ih, w_hh, b_ih, b_hh, w_lin, b_lin)
    out = jax.block_until_ready(out)

    ref = lstm_reference(input_seq, w_ih, w_hh, b_ih, b_hh, w_lin, b_lin)
    assert out.shape == (5, output_size), out.shape
    # Slightly relaxed tolerance: tanh(g) is computed as 2*sigmoid(2g)-1 inside
    # the kernel (mathematically exact, tiny rounding drift over 8 steps).
    assert jnp.allclose(out, ref, atol=1e-4, rtol=1e-4), (out, ref)

    print("KERNEL_OK")
</pallas_src>

<mosaic_0001>
module attributes {stable_mosaic.version = 11 : i64} {
  func.func @lstm_kernel(%arg0: memref<8x1xf32, #tpu.memory_space<vmem>>, %arg1: memref<1x128xf32, #tpu.memory_space<vmem>>, %arg2: memref<1x128xf32, #tpu.memory_space<vmem>>, %arg3: memref<32x128xf32, #tpu.memory_space<vmem>>, %arg4: memref<32x1xf32, #tpu.memory_space<vmem>>, %arg5: memref<1x1xf32, #tpu.memory_space<vmem>>, %arg6: memref<5x1xf32, #tpu.memory_space<vmem>>) attributes {dimension_semantics = [], scalar_prefetch = 0 : i64, scratch_operands = 0 : i64, tpu.core_type = #tpu.core_type<tc>} {
    %c0 = arith.constant 0 : index
    %c0_0 = arith.constant 0 : index
    %0 = vector.load %arg0[%c0, %c0_0] : memref<8x1xf32, #tpu.memory_space<vmem>>, vector<8x1xf32>
    %c0_1 = arith.constant 0 : index
    %c0_2 = arith.constant 0 : index
    %1 = vector.load %arg1[%c0_1, %c0_2] : memref<1x128xf32, #tpu.memory_space<vmem>>, vector<1x128xf32>
    %2 = vector.broadcast %0 : vector<8x1xf32> to vector<8x128xf32>
    %3 = vector.broadcast %1 : vector<1x128xf32> to vector<8x128xf32>
    %4 = arith.mulf %2, %3 : vector<8x128xf32>
    %c0_3 = arith.constant 0 : index
    %c0_4 = arith.constant 0 : index
    %5 = vector.load %arg2[%c0_3, %c0_4] : memref<1x128xf32, #tpu.memory_space<vmem>>, vector<1x128xf32>
    %6 = vector.broadcast %5 : vector<1x128xf32> to vector<8x128xf32>
    %7 = arith.addf %4, %6 : vector<8x128xf32>
    %c0_5 = arith.constant 0 : index
    %c0_6 = arith.constant 0 : index
    %8 = vector.load %arg3[%c0_5, %c0_6] : memref<32x128xf32, #tpu.memory_space<vmem>>, vector<32x128xf32>
    %cst = arith.constant 0.000000e+00 : f32
    %9 = vector.broadcast %cst : f32 to vector<1x32xf32>
    %cst_7 = arith.constant 0.000000e+00 : f32
    %10 = vector.broadcast %cst_7 : f32 to vector<1x32xf32>
    %cst_8 = arith.constant dense<0.000000e+00> : vector<1x128xf32>
    %11 = tpu.matmul %9, %8, %cst_8 {dimension_numbers = #tpu.dot_dimension_numbers<[1], [0], [0], [1], [0, 0, 1, 1], [], []>} : vector<1x32xf32>, vector<32x128xf32>, vector<1x128xf32> -> vector<1x128xf32>
    %12 = vector.extract_strided_slice %7 {offsets = [0, 0], sizes = [1, 128], strides = [1, 1]} : vector<8x128xf32> to vector<1x128xf32>
    %13 = arith.addf %11, %12 : vector<1x128xf32>
    %14 = arith.negf %13 : vector<1x128xf32>
    %15 = math.exp %14 : vector<1x128xf32>
    %cst_9 = arith.constant 1.000000e+00 : f32
    %16 = vector.broadcast %cst_9 : f32 to vector<1x128xf32>
    %17 = arith.addf %16, %15 : vector<1x128xf32>
    %18 = arith.divf %16, %17 : vector<1x128xf32>
    %19 = vector.extract_strided_slice %18 {offsets = [0, 0], sizes = [1, 32], strides = [1, 1]} : vector<1x128xf32> to vector<1x32xf32>
    %20 = vector.extract_strided_slice %18 {offsets = [0, 32], sizes = [1, 32], strides = [1, 1]} : vector<1x128xf32> to vector<1x32xf32>
    %21 = vector.extract_strided_slice %18 {offsets = [0, 64], sizes = [1, 32], strides = [1, 1]} : vector<1x128xf32> to vector<1x32xf32>
    %cst_10 = arith.constant 2.000000e+00 : f32
    %22 = vector.broadcast %cst_10 : f32 to vector<1x32xf32>
    %23 = arith.mulf %22, %21 : vector<1x32xf32>
    %cst_11 = arith.constant 1.000000e+00 : f32
    %24 = vector.broadcast %cst_11 : f32 to vector<1x32xf32>
    %25 = arith.subf %23, %24 : vector<1x32xf32>
    %26 = vector.extract_strided_slice %18 {offsets = [0, 96], sizes = [1, 32], strides = [1, 1]} : vector<1x128xf32> to vector<1x32xf32>
    %27 = arith.mulf %20, %10 : vector<1x32xf32>
    %28 = arith.mulf %19, %25 : vector<1x32xf32>
    %29 = arith.addf %27, %28 : vector<1x32xf32>
    %30 = math.tanh %29 : vector<1x32xf32>
    %31 = arith.mulf %26, %30 : vector<1x32xf32>
    %cst_12 = arith.constant dense<0.000000e+00> : vector<1x128xf32>
    %32 = tpu.matmul %31, %8, %cst_12 {dimension_numbers = #tpu.dot_dimension_numbers<[1], [0], [0], [1], [0, 0, 1, 1], [], []>} : vector<1x32xf32>, vector<32x128xf32>, vector<1x128xf32> -> vector<1x128xf32>
    %33 = vector.extract_strided_slice %7 {offsets = [1, 0], sizes = [1, 128], strides = [1, 1]} : vector<8x128xf32> to vector<1x128xf32>
    %34 = arith.addf %32, %33 : vector<1x128xf32>
    %35 = arith.negf %34 : vector<1x128xf32>
    %36 = math.exp %35 : vector<1x128xf32>
    %cst_13 = arith.constant 1.000000e+00 : f32
    %37 = vector.broadcast %cst_13 : f32 to vector<1x128xf32>
    %38 = arith.addf %37, %36 : vector<1x128xf32>
    %39 = arith.divf %37, %38 : vector<1x128xf32>
    %40 = vector.extract_strided_slice %39 {offsets = [0, 0], sizes = [1, 32], strides = [1, 1]} : vector<1x128xf32> to vector<1x32xf32>
    %41 = vector.extract_strided_slice %39 {offsets = [0, 32], sizes = [1, 32], strides = [1, 1]} : vector<1x128xf32> to vector<1x32xf32>
    %42 = vector.extract_strided_slice %39 {offsets = [0, 64], sizes = [1, 32], strides = [1, 1]} : vector<1x128xf32> to vector<1x32xf32>
    %cst_14 = arith.constant 2.000000e+00 : f32
    %43 = vector.broadcast %cst_14 : f32 to vector<1x32xf32>
    %44 = arith.mulf %43, %42 : vector<1x32xf32>
    %cst_15 = arith.constant 1.000000e+00 : f32
    %45 = vector.broadcast %cst_15 : f32 to vector<1x32xf32>
    %46 = arith.subf %44, %45 : vector<1x32xf32>
    %47 = vector.extract_strided_slice %39 {offsets = [0, 96], sizes = [1, 32], strides = [1, 1]} : vector<1x128xf32> to vector<1x32xf32>
    %48 = arith.mulf %41, %29 : vector<1x32xf32>
    %49 = arith.mulf %40, %46 : vector<1x32xf32>
    %50 = arith.addf %48, %49 : vector<1x32xf32>
    %51 = math.tanh %50 : vector<1x32xf32>
    %52 = arith.mulf %47, %51 : vector<1x32xf32>
    %cst_16 = arith.constant dense<0.000000e+00> : vector<1x128xf32>
    %53 = tpu.matmul %52, %8, %cst_16 {dimension_numbers = #tpu.dot_dimension_numbers<[1], [0], [0], [1], [0, 0, 1, 1], [], []>} : vector<1x32xf32>, vector<32x128xf32>, vector<1x128xf32> -> vector<1x128xf32>
    %54 = vector.extract_strided_slice %7 {offsets = [2, 0], sizes = [1, 128], strides = [1, 1]} : vector<8x128xf32> to vector<1x128xf32>
    %55 = arith.addf %53, %54 : vector<1x128xf32>
    %56 = arith.negf %55 : vector<1x128xf32>
    %57 = math.exp %56 : vector<1x128xf32>
    %cst_17 = arith.constant 1.000000e+00 : f32
    %58 = vector.broadcast %cst_17 : f32 to vector<1x128xf32>
    %59 = arith.addf %58, %57 : vector<1x128xf32>
    %60 = arith.divf %58, %59 : vector<1x128xf32>
    %61 = vector.extract_strided_slice %60 {offsets = [0, 0], sizes = [1, 32], strides = [1, 1]} : vector<1x128xf32> to vector<1x32xf32>
    %62 = vector.extract_strided_slice %60 {offsets = [0, 32], sizes = [1, 32], strides = [1, 1]} : vector<1x128xf32> to vector<1x32xf32>
    %63 = vector.extract_strided_slice %60 {offsets = [0, 64], sizes = [1, 32], strides = [1, 1]} : vector<1x128xf32> to vector<1x32xf32>
    %cst_18 = arith.constant 2.000000e+00 : f32
    %64 = vector.broadcast %cst_18 : f32 to vector<1x32xf32>
    %65 = arith.mulf %64, %63 : vector<1x32xf32>
    %cst_19 = arith.constant 1.000000e+00 : f32
    %66 = vector.broadcast %cst_19 : f32 to vector<1x32xf32>
    %67 = arith.subf %65, %66 : vector<1x32xf32>
    %68 = vector.extract_strided_slice %60 {offsets = [0, 96], sizes = [1, 32], strides = [1, 1]} : vector<1x128xf32> to vector<1x32xf32>
    %69 = arith.mulf %62, %50 : vector<1x32xf32>
    %70 = arith.mulf %61, %67 : vector<1x32xf32>
    %71 = arith.addf %69, %70 : vector<1x32xf32>
    %72 = math.tanh %71 : vector<1x32xf32>
    %73 = arith.mulf %68, %72 : vector<1x32xf32>
    %cst_20 = arith.constant dense<0.000000e+00> : vector<1x128xf32>
    %74 = tpu.matmul %73, %8, %cst_20 {dimension_numbers = #tpu.dot_dimension_numbers<[1], [0], [0], [1], [0, 0, 1, 1], [], []>} : vector<1x32xf32>, vector<32x128xf32>, vector<1x128xf32> -> vector<1x128xf32>
    %75 = vector.extract_strided_slice %7 {offsets = [3, 0], sizes = [1, 128], strides = [1, 1]} : vector<8x128xf32> to vector<1x128xf32>
    %76 = arith.addf %74, %75 : vector<1x128xf32>
    %77 = arith.negf %76 : vector<1x128xf32>
    %78 = math.exp %77 : vector<1x128xf32>
    %cst_21 = arith.constant 1.000000e+00 : f32
    %79 = vector.broadcast %cst_21 : f32 to vector<1x128xf32>
    %80 = arith.addf %79, %78 : vector<1x128xf32>
    %81 = arith.divf %79, %80 : vector<1x128xf32>
    %82 = vector.extract_strided_slice %81 {offsets = [0, 0], sizes = [1, 32], strides = [1, 1]} : vector<1x128xf32> to vector<1x32xf32>
    %83 = vector.extract_strided_slice %81 {offsets = [0, 32], sizes = [1, 32], strides = [1, 1]} : vector<1x128xf32> to vector<1x32xf32>
    %84 = vector.extract_strided_slice %81 {offsets = [0, 64], sizes = [1, 32], strides = [1, 1]} : vector<1x128xf32> to vector<1x32xf32>
    %cst_22 = arith.constant 2.000000e+00 : f32
    %85 = vector.broadcast %cst_22 : f32 to vector<1x32xf32>
    %86 = arith.mulf %85, %84 : vector<1x32xf32>
    %cst_23 = arith.constant 1.000000e+00 : f32
    %87 = vector.broadcast %cst_23 : f32 to vector<1x32xf32>
    %88 = arith.subf %86, %87 : vector<1x32xf32>
    %89 = vector.extract_strided_slice %81 {offsets = [0, 96], sizes = [1, 32], strides = [1, 1]} : vector<1x128xf32> to vector<1x32xf32>
    %90 = arith.mulf %83, %71 : vector<1x32xf32>
    %91 = arith.mulf %82, %88 : vector<1x32xf32>
    %92 = arith.addf %90, %91 : vector<1x32xf32>
    %93 = math.tanh %92 : vector<1x32xf32>
    %94 = arith.mulf %89, %93 : vector<1x32xf32>
    %cst_24 = arith.constant dense<0.000000e+00> : vector<1x128xf32>
    %95 = tpu.matmul %94, %8, %cst_24 {dimension_numbers = #tpu.dot_dimension_numbers<[1], [0], [0], [1], [0, 0, 1, 1], [], []>} : vector<1x32xf32>, vector<32x128xf32>, vector<1x128xf32> -> vector<1x128xf32>
    %96 = vector.extract_strided_slice %7 {offsets = [4, 0], sizes = [1, 128], strides = [1, 1]} : vector<8x128xf32> to vector<1x128xf32>
    %97 = arith.addf %95, %96 : vector<1x128xf32>
    %98 = arith.negf %97 : vector<1x128xf32>
    %99 = math.exp %98 : vector<1x128xf32>
    %cst_25 = arith.constant 1.000000e+00 : f32
    %100 = vector.broadcast %cst_25 : f32 to vector<1x128xf32>
    %101 = arith.addf %100, %99 : vector<1x128xf32>
    %102 = arith.divf %100, %101 : vector<1x128xf32>
    %103 = vector.extract_strided_slice %102 {offsets = [0, 0], sizes = [1, 32], strides = [1, 1]} : vector<1x128xf32> to vector<1x32xf32>
    %104 = vector.extract_strided_slice %102 {offsets = [0, 32], sizes = [1, 32], strides = [1, 1]} : vector<1x128xf32> to vector<1x32xf32>
    %105 = vector.extract_strided_slice %102 {offsets = [0, 64], sizes = [1, 32], strides = [1, 1]} : vector<1x128xf32> to vector<1x32xf32>
    %cst_26 = arith.constant 2.000000e+00 : f32
    %106 = vector.broadcast %cst_26 : f32 to vector<1x32xf32>
    %107 = arith.mulf %106, %105 : vector<1x32xf32>
    %cst_27 = arith.constant 1.000000e+00 : f32
    %108 = vector.broadcast %cst_27 : f32 to vector<1x32xf32>
    %109 = arith.subf %107, %108 : vector<1x32xf32>
    %110 = vector.extract_strided_slice %102 {offsets = [0, 96], sizes = [1, 32], strides = [1, 1]} : vector<1x128xf32> to vector<1x32xf32>
    %111 = arith.mulf %104, %92 : vector<1x32xf32>
    %112 = arith.mulf %103, %109 : vector<1x32xf32>
    %113 = arith.addf %111, %112 : vector<1x32xf32>
    %114 = math.tanh %113 : vector<1x32xf32>
    %115 = arith.mulf %110, %114 : vector<1x32xf32>
    %cst_28 = arith.constant dense<0.000000e+00> : vector<1x128xf32>
    %116 = tpu.matmul %115, %8, %cst_28 {dimension_numbers = #tpu.dot_dimension_numbers<[1], [0], [0], [1], [0, 0, 1, 1], [], []>} : vector<1x32xf32>, vector<32x128xf32>, vector<1x128xf32> -> vector<1x128xf32>
    %117 = vector.extract_strided_slice %7 {offsets = [5, 0], sizes = [1, 128], strides = [1, 1]} : vector<8x128xf32> to vector<1x128xf32>
    %118 = arith.addf %116, %117 : vector<1x128xf32>
    %119 = arith.negf %118 : vector<1x128xf32>
    %120 = math.exp %119 : vector<1x128xf32>
    %cst_29 = arith.constant 1.000000e+00 : f32
    %121 = vector.broadcast %cst_29 : f32 to vector<1x128xf32>
    %122 = arith.addf %121, %120 : vector<1x128xf32>
    %123 = arith.divf %121, %122 : vector<1x128xf32>
    %124 = vector.extract_strided_slice %123 {offsets = [0, 0], sizes = [1, 32], strides = [1, 1]} : vector<1x128xf32> to vector<1x32xf32>
    %125 = vector.extract_strided_slice %123 {offsets = [0, 32], sizes = [1, 32], strides = [1, 1]} : vector<1x128xf32> to vector<1x32xf32>
    %126 = vector.extract_strided_slice %123 {offsets = [0, 64], sizes = [1, 32], strides = [1, 1]} : vector<1x128xf32> to vector<1x32xf32>
    %cst_30 = arith.constant 2.000000e+00 : f32
    %127 = vector.broadcast %cst_30 : f32 to vector<1x32xf32>
    %128 = arith.mulf %127, %126 : vector<1x32xf32>
    %cst_31 = arith.constant 1.000000e+00 : f32
    %129 = vector.broadcast %cst_31 : f32 to vector<1x32xf32>
    %130 = arith.subf %128, %129 : vector<1x32xf32>
    %131 = vector.extract_strided_slice %123 {offsets = [0, 96], sizes = [1, 32], strides = [1, 1]} : vector<1x128xf32> to vector<1x32xf32>
    %132 = arith.mulf %125, %113 : vector<1x32xf32>
    %133 = arith.mulf %124, %130 : vector<1x32xf32>
    %134 = arith.addf %132, %133 : vector<1x32xf32>
    %135 = math.tanh %134 : vector<1x32xf32>
    %136 = arith.mulf %131, %135 : vector<1x32xf32>
    %cst_32 = arith.constant dense<0.000000e+00> : vector<1x128xf32>
    %137 = tpu.matmul %136, %8, %cst_32 {dimension_numbers = #tpu.dot_dimension_numbers<[1], [0], [0], [1], [0, 0, 1, 1], [], []>} : vector<1x32xf32>, vector<32x128xf32>, vector<1x128xf32> -> vector<1x128xf32>
    %138 = vector.extract_strided_slice %7 {offsets = [6, 0], sizes = [1, 128], strides = [1, 1]} : vector<8x128xf32> to vector<1x128xf32>
    %139 = arith.addf %137, %138 : vector<1x128xf32>
    %140 = arith.negf %139 : vector<1x128xf32>
    %141 = math.exp %140 : vector<1x128xf32>
    %cst_33 = arith.constant 1.000000e+00 : f32
    %142 = vector.broadcast %cst_33 : f32 to vector<1x128xf32>
    %143 = arith.addf %142, %141 : vector<1x128xf32>
    %144 = arith.divf %142, %143 : vector<1x128xf32>
    %145 = vector.extract_strided_slice %144 {offsets = [0, 0], sizes = [1, 32], strides = [1, 1]} : vector<1x128xf32> to vector<1x32xf32>
    %146 = vector.extract_strided_slice %144 {offsets = [0, 32], sizes = [1, 32], strides = [1, 1]} : vector<1x128xf32> to vector<1x32xf32>
    %147 = vector.extract_strided_slice %144 {offsets = [0, 64], sizes = [1, 32], strides = [1, 1]} : vector<1x128xf32> to vector<1x32xf32>
    %cst_34 = arith.constant 2.000000e+00 : f32
    %148 = vector.broadcast %cst_34 : f32 to vector<1x32xf32>
    %149 = arith.mulf %148, %147 : vector<1x32xf32>
    %cst_35 = arith.constant 1.000000e+00 : f32
    %150 = vector.broadcast %cst_35 : f32 to vector<1x32xf32>
    %151 = arith.subf %149, %150 : vector<1x32xf32>
    %152 = vector.extract_strided_slice %144 {offsets = [0, 96], sizes = [1, 32], strides = [1, 1]} : vector<1x128xf32> to vector<1x32xf32>
    %153 = arith.mulf %146, %134 : vector<1x32xf32>
    %154 = arith.mulf %145, %151 : vector<1x32xf32>
    %155 = arith.addf %153, %154 : vector<1x32xf32>
    %156 = math.tanh %155 : vector<1x32xf32>
    %157 = arith.mulf %152, %156 : vector<1x32xf32>
    %cst_36 = arith.constant dense<0.000000e+00> : vector<1x128xf32>
    %158 = tpu.matmul %157, %8, %cst_36 {dimension_numbers = #tpu.dot_dimension_numbers<[1], [0], [0], [1], [0, 0, 1, 1], [], []>} : vector<1x32xf32>, vector<32x128xf32>, vector<1x128xf32> -> vector<1x128xf32>
    %159 = vector.extract_strided_slice %7 {offsets = [7, 0], sizes = [1, 128], strides = [1, 1]} : vector<8x128xf32> to vector<1x128xf32>
    %160 = arith.addf %158, %159 : vector<1x128xf32>
    %161 = arith.negf %160 : vector<1x128xf32>
    %162 = math.exp %161 : vector<1x128xf32>
    %cst_37 = arith.constant 1.000000e+00 : f32
    %163 = vector.broadcast %cst_37 : f32 to vector<1x128xf32>
    %164 = arith.addf %163, %162 : vector<1x128xf32>
    %165 = arith.divf %163, %164 : vector<1x128xf32>
    %166 = vector.extract_strided_slice %165 {offsets = [0, 0], sizes = [1, 32], strides = [1, 1]} : vector<1x128xf32> to vector<1x32xf32>
    %167 = vector.extract_strided_slice %165 {offsets = [0, 32], sizes = [1, 32], strides = [1, 1]} : vector<1x128xf32> to vector<1x32xf32>
    %168 = vector.extract_strided_slice %165 {offsets = [0, 64], sizes = [1, 32], strides = [1, 1]} : vector<1x128xf32> to vector<1x32xf32>
    %cst_38 = arith.constant 2.000000e+00 : f32
    %169 = vector.broadcast %cst_38 : f32 to vector<1x32xf32>
    %170 = arith.mulf %169, %168 : vector<1x32xf32>
    %cst_39 = arith.constant 1.000000e+00 : f32
    %171 = vector.broadcast %cst_39 : f32 to vector<1x32xf32>
    %172 = arith.subf %170, %171 : vector<1x32xf32>
    %173 = vector.extract_strided_slice %165 {offsets = [0, 96], sizes = [1, 32], strides = [1, 1]} : vector<1x128xf32> to vector<1x32xf32>
    %174 = arith.mulf %167, %155 : vector<1x32xf32>
    %175 = arith.mulf %166, %172 : vector<1x32xf32>
    %176 = arith.addf %174, %175 : vector<1x32xf32>
    %177 = math.tanh %176 : vector<1x32xf32>
    %178 = arith.mulf %173, %177 : vector<1x32xf32>
    %179 = tpu.concatenate %94, %115, %136, %157, %178 in 0 : vector<1x32xf32>, vector<1x32xf32>, vector<1x32xf32>, vector<1x32xf32>, vector<1x32xf32> -> vector<5x32xf32>
    %c0_40 = arith.constant 0 : index
    %c0_41 = arith.constant 0 : index
    %180 = vector.load %arg4[%c0_40, %c0_41] : memref<32x1xf32, #tpu.memory_space<vmem>>, vector<32x1xf32>
    %cst_42 = arith.constant dense<0.000000e+00> : vector<5x1xf32>
    %181 = tpu.matmul %179, %180, %cst_42 {dimension_numbers = #tpu.dot_dimension_numbers<[1], [0], [0], [1], [0, 0, 1, 1], [], []>} : vector<5x32xf32>, vector<32x1xf32>, vector<5x1xf32> -> vector<5x1xf32>
    %c0_43 = arith.constant 0 : index
    %c0_44 = arith.constant 0 : index
    %182 = vector.load %arg5[%c0_43, %c0_44] : memref<1x1xf32, #tpu.memory_space<vmem>>, vector<1x1xf32>
    %183 = vector.broadcast %182 : vector<1x1xf32> to vector<5x1xf32>
    %184 = arith.addf %181, %183 : vector<5x1xf32>
    %c0_45 = arith.constant 0 : index
    %c0_46 = arith.constant 0 : index
    %185 = vector.load %arg6[%c0_45, %c0_46] : memref<5x1xf32, #tpu.memory_space<vmem>>, vector<5x1xf32>
    tpu.vector_store %arg6[%c0_45, %c0_46], %184 {strides = array<i32>} : memref<5x1xf32, #tpu.memory_space<vmem>>, vector<5x1xf32>,
    return
  }
}

</mosaic_0001>

<llo_original>
// kernel: lstm_forward.1
$region0: #{lstm_forward.1}
  #allocation0 [shape = 'u32[]', space=smem, size = 0x4, offset = 0x4, fixed_abs, tag = 'smem constant byte address 0x4 - core index']
  #allocation1 [shape = 'u32[144,128]{1,0:T(1,128)}', space=vmem, size = 0x12000, scoped, tag = 'internal scratch']
  #allocation2 [shape = 'f32[1,1]{1,0:T(1,128)S(1)}', space=vmem, size = 0x200, scoped, tag = 'scoped memory for lstm_forward.1']
  %s0 = inlined_call_operand.vmem [shape: f32[8,1], index: 0, kind: input, shape index: {}]
  %s1 = inlined_call_operand.vmem [shape: f32[1,128], index: 1, kind: input, shape index: {}]
  %s2 = inlined_call_operand.vmem [shape: f32[1,128], index: 2, kind: input, shape index: {}]
  %s3 = inlined_call_operand.vmem [shape: f32[32,128], index: 3, kind: input, shape index: {}]
  %s4 = inlined_call_operand.vmem [shape: f32[32,1], index: 4, kind: input, shape index: {}]
  %s5 = inlined_call_operand.<no memory space> [shape: f32[1,1], index: 5, kind: input, shape index: {}]
  %s6 = inlined_call_operand.vmem [shape: f32[5,1], index: 6, kind: output, shape index: {}]
  %s7 = sld [smem:[#allocation0]]
  $region34: #{lstm_forward.1} parent=0
    _
  %s9 = ssub.s32 1, %s7
  %s10 = scalar_select 0, %s9, %s7
  %v11 = vstv %s5
  %12 = vst [vmem:[#allocation2] sm:$0x1] %v11
  // Predicated region
  $region2: #{lstm_forward.1} parent=0 // pred_check
    _
  $region3: #{lstm_forward.1} parent=0 // pred_check_branch
    %14 = sbr.rel (0) target = $region5
  $region4: #{lstm_forward.1} parent=0 // pred_region
    _
  $region5: #{lstm_forward.1} parent=0 // pred_fallthru
    _
  // Predicated region
  $region6: #{lstm_forward.1} parent=0 // pred_check
    _
  $region7: #{lstm_forward.1} parent=0 // pred_check_branch
    %16 = sbr.rel (0) target = $region9
  $region8: #{lstm_forward.1} parent=0 // pred_region
    _
  $region9: #{lstm_forward.1} parent=0 // pred_fallthru
    _
  // Predicated region
  $region10: #{lstm_forward.1} parent=0 // pred_check
    _
  $region11: #{lstm_forward.1} parent=0 // pred_check_branch
    %18 = sbr.rel (0) target = $region13
  $region12: #{lstm_forward.1} parent=0 // pred_region
    _
  $region13: #{lstm_forward.1} parent=0 // pred_fallthru
    _
  // Predicated region
  $region14: #{lstm_forward.1} parent=0 // pred_check
    _
  $region15: #{lstm_forward.1} parent=0 // pred_check_branch
    %20 = sbr.rel (0) target = $region17
  $region16: #{lstm_forward.1} parent=0 // pred_region
    _
  $region17: #{lstm_forward.1} parent=0 // pred_fallthru
    _
  // Predicated region
  $region18: #{lstm_forward.1} parent=0 // pred_check
    _
  $region19: #{lstm_forward.1} parent=0 // pred_check_branch
    %22 = sbr.rel (0) target = $region21
  $region20: #{lstm_forward.1} parent=0 // pred_region
    _
  $region21: #{lstm_forward.1} parent=0 // pred_fallthru
    _
  // Predicated region
  $region22: #{lstm_forward.1} parent=0 // pred_check
    _
  $region23: #{lstm_forward.1} parent=0 // pred_check_branch
    %24 = sbr.rel (0) target = $region25
  $region24: #{lstm_forward.1} parent=0 // pred_region
    _
  $region25: #{lstm_forward.1} parent=0 // pred_fallthru
    _
  %v25 = vld [vmem:[%s0] sm:$0xff]
  %v26 = vld [vmem:[%s1] sm:$0x1]
  %28 = vset.pattern.permute.xlu0 0
  %29 = vperm.xlu0 %28, %v25
  %v30 = vpop.permute.xlu0 %29
  %v33 = vlaneseq
  %v34 = vshrl.u32 %v33, 7
  %v35 = vsub.s32 0, %v34
  %v36 = vrot.slane %v26, %v35
  %v38 = vmul.f32 %v30, %v36
  %v39 = vld [vmem:[%s2] sm:$0x1]
  %v41 = vlaneseq
  %v42 = vshrl.u32 %v41, 7
  %v43 = vsub.s32 0, %v42
  %v44 = vrot.slane %v39, %v43
  %v46 = vadd.f32 %v38, %v44
  %v47 = vld [vmem:[%s3] sm:$0xff]
  %v48 = vld [vmem:[%s3 + $0x8] sm:$0xff]
  %v49 = vld [vmem:[%s3 + $0x10] sm:$0xff]
  %v50 = vld [vmem:[%s3 + $0x18] sm:$0xff]
  %vm51 = vcmask 261120
  %v53 = vsel %vm51, 0.0, 0
  %55 = vmatprep.subr.mxu0 0.0
  %56 = vmatpush1.msra.mxu0 %v47
  %57 = vmatprep.subr.mxu0 0.0
  %58 = vmatpush1.msra.mxu0 %v48
  %59 = vmatprep.subr.mxu0 0.0
  %60 = vmatpush1.msra.mxu0 %v49
  %61 = vmatprep.subr.mxu0 0.0
  %62 = vmatpush1.msra.mxu0 %v50
  %63 = vmatprep.subr.mxu0 0.0
  %64 = vmatpush1.msra.mxu0 0.0
  %65 = vmatprep.subr.mxu0 0.0
  %66 = vmatpush1.msra.mxu0 0.0
  %67 = vmatprep.subr.mxu0 0.0
  %68 = vmatpush1.msra.mxu0 0.0
  %69 = vmatprep.subr.mxu0 0.0
  %70 = vmatpush1.msra.mxu0 0.0
  %71 = vmatprep.subr.mxu0 0.0
  %72 = vmatpush1.msra.mxu0 0.0
  %73 = vmatprep.subr.mxu0 0.0
  %74 = vmatpush1.msra.mxu0 0.0
  %75 = vmatprep.subr.mxu0 0.0
  %76 = vmatpush1.msra.mxu0 0.0
  %77 = vmatprep.subr.mxu0 0.0
  %78 = vmatpush1.msra.mxu0 0.0
  %79 = vmatprep.subr.mxu0 0.0
  %80 = vmatpush1.msra.mxu0 0.0
  %81 = vmatprep.subr.mxu0 0.0
  %82 = vmatpush1.msra.mxu0 0.0
  %83 = vmatprep.subr.mxu0 0.0
  %84 = vmatpush1.msra.mxu0 0.0
  %85 = vmatprep.subr.mxu0 0.0
  %86 = vmatpush1.msra.mxu0 0.0
  %87 = vmatprep.subr.mxu0 0.0
  %88 = vmatpush1.msra.mxu0 0.0
  %89 = vmatprep.subr.mxu0 0.0
  %90 = vmatpush1.msra.mxu0 0.0
  %91 = vmatprep.subr.mxu0 0.0
  %92 = vmatpush1.msra.mxu0 0.0
  %93 = vmatprep.subr.mxu0 0.0
  %94 = vmatpush1.msra.mxu0 0.0
  %95 = vmatprep.subr.mxu0 0.0
  %96 = vmatpush1.msra.mxu0 0.0
  %97 = vmatprep.subr.mxu0 0.0
  %98 = vmatpush1.msra.mxu0 0.0
  %99 = vmatprep.subr.mxu0 0.0
  %100 = vmatpush1.msra.mxu0 0.0
  %101 = vmatprep.subr.mxu0 0.0
  %102 = vmatpush1.msra.mxu0 0.0
  %103 = vmatprep.subr.mxu0 0.0
  %104 = vmatpush1.msra.mxu0 0.0
  %105 = vmatprep.subr.mxu0 0.0
  %106 = vmatpush1.msra.mxu0 0.0
  %107 = vmatprep.subr.mxu0 0.0
  %108 = vmatpush1.msra.mxu0 0.0
  %109 = vmatprep.subr.mxu0 0.0
  %110 = vmatpush1.msra.mxu0 0.0
  %111 = vmatprep.subr.mxu0 0.0
  %112 = vmatpush1.msra.mxu0 0.0
  %113 = vmatprep.subr.mxu0 0.0
  %114 = vmatpush1.msra.mxu0 0.0
  %115 = vmatprep.subr.mxu0 0.0
  %116 = vmatpush1.msra.mxu0 0.0
  %117 = vmatprep.subr.mxu0 0.0
  %118 = vmatpush1.msra.mxu0 0.0
  %119 = vmatprep.mubr.f32.mxu0 0.0
  %120 = vmatmul.mubr.f32.gmra.mrb[0].mxu0 %v53
  %v121 = vpop.f32.mrb[0].mxu0
  %v122 = vadd.f32 %v46, %v121
  %v123 = vpop.f32.mrb[0].mxu0
  %124 = vdwg.mxu0
  %v125 = vxor.u32 %v122, 2147483648
  %v126 = vmul.f32 %v125, 1.442695
  %v127 = vpow.pop %v126
  %v128 = vadd.f32 %v127, 1.0
  %v129 = vrcp.pop %v128
  %v130 = vmul.f32 1.0, %v129
  %v131 = vmul.f32 %v130, 2.0
  %v132 = vsub.f32 %v131, 1.0
  %v133 = vmul.f32 %v130, 0.0
  %135 = vrot.lane.b32.xlu0 %v132, 64
  %v136 = vpop.permute.xlu0 %135
  %v138 = vmul.f32 %v130, %v136
  %140 = vrot.lane.b32.xlu0 %v138, 32
  %v141 = vpop.permute.xlu0 %140
  %v143 = vadd.f32 %v133, %v141
  %v144 = vtanh.pop %v143
  %146 = vrot.lane.b32.xlu0 %v144, 64
  %v147 = vpop.permute.xlu0 %146
  %v149 = vmul.f32 %v130, %v147
  %151 = vrot.lane.b32.xlu0 %v149, 32
  %v152 = vpop.permute.xlu0 %151
  %v154 = vrot.slane %v46, 1
  %v156 = vsel %vm51, %v152, 0
  %158 = vmatprep.subr.mxu0 0.0
  %159 = vmatpush1.msra.mxu0 %v47
  %160 = vmatprep.subr.mxu0 0.0
  %161 = vmatpush1.msra.mxu0 %v48
  %162 = vmatprep.subr.mxu0 0.0
  %163 = vmatpush1.msra.mxu0 %v49
  %164 = vmatprep.subr.mxu0 0.0
  %165 = vmatpush1.msra.mxu0 %v50
  %166 = vmatprep.subr.mxu0 0.0
  %167 = vmatpush1.msra.mxu0 0.0
  %168 = vmatprep.subr.mxu0 0.0
  %169 = vmatpush1.msra.mxu0 0.0
  %170 = vmatprep.subr.mxu0 0.0
  %171 = vmatpush1.msra.mxu0 0.0
  %172 = vmatprep.subr.mxu0 0.0
  %173 = vmatpush1.msra.mxu0 0.0
  %174 = vmatprep.subr.mxu0 0.0
  %175 = vmatpush1.msra.mxu0 0.0
  %176 = vmatprep.subr.mxu0 0.0
  %177 = vmatpush1.msra.mxu0 0.0
  %178 = vmatprep.subr.mxu0 0.0
  %179 = vmatpush1.msra.mxu0 0.0
  %180 = vmatprep.subr.mxu0 0.0
  %181 = vmatpush1.msra.mxu0 0.0
  %182 = vmatprep.subr.mxu0 0.0
  %183 = vmatpush1.msra.mxu0 0.0
  %184 = vmatprep.subr.mxu0 0.0
  %185 = vmatpush1.msra.mxu0 0.0
  %186 = vmatprep.subr.mxu0 0.0
  %187 = vmatpush1.msra.mxu0 0.0
  %188 = vmatprep.subr.mxu0 0.0
  %189 = vmatpush1.msra.mxu0 0.0
  %190 = vmatprep.subr.mxu0 0.0
  %191 = vmatpush1.msra.mxu0 0.0
  %192 = vmatprep.subr.mxu0 0.0
  %193 = vmatpush1.msra.mxu0 0.0
  %194 = vmatprep.subr.mxu0 0.0
  %195 = vmatpush1.msra.mxu0 0.0
  %196 = vmatprep.subr.mxu0 0.0
  %197 = vmatpush1.msra.mxu0 0.0
  %198 = vmatprep.subr.mxu0 0.0
  %199 = vmatpush1.msra.mxu0 0.0
  %200 = vmatprep.subr.mxu0 0.0
  %201 = vmatpush1.msra.mxu0 0.0
  %202 = vmatprep.subr.mxu0 0.0
  %203 = vmatpush1.msra.mxu0 0.0
  %204 = vmatprep.subr.mxu0 0.0
  %205 = vmatpush1.msra.mxu0 0.0
  %206 = vmatprep.subr.mxu0 0.0
  %207 = vmatpush1.msra.mxu0 0.0
  %208 = vmatprep.subr.mxu0 0.0
  %209 = vmatpush1.msra.mxu0 0.0
  %210 = vmatprep.subr.mxu0 0.0
  %211 = vmatpush1.msra.mxu0 0.0
  %212 = vmatprep.subr.mxu0 0.0
  %213 = vmatpush1.msra.mxu0 0.0
  %214 = vmatprep.subr.mxu0 0.0
  %215 = vmatpush1.msra.mxu0 0.0
  %216 = vmatprep.subr.mxu0 0.0
  %217 = vmatpush1.msra.mxu0 0.0
  %218 = vmatprep.subr.mxu0 0.0
  %219 = vmatpush1.msra.mxu0 0.0
  %220 = vmatprep.subr.mxu0 0.0
  %221 = vmatpush1.msra.mxu0 0.0
  %222 = vmatprep.mubr.f32.mxu0 0.0
  %223 = vmatmul.mubr.f32.gmra.mrb[0].mxu0 %v156
  %v224 = vpop.f32.mrb[0].mxu0
  %v225 = vadd.f32 %v154, %v224
  %v226 = vpop.f32.mrb[0].mxu0
  %227 = vdwg.mxu0
  %v228 = vxor.u32 %v225, 2147483648
  %v229 = vmul.f32 %v228, 1.442695
  %v230 = vpow.pop %v229
  %v231 = vadd.f32 %v230, 1.0
  %v232 = vrcp.pop %v231
  %v233 = vmul.f32 1.0, %v232
  %v234 = vmul.f32 %v233, 2.0
  %v235 = vsub.f32 %v234, 1.0
  %v236 = vmul.f32 %v233, %v143
  %238 = vrot.lane.b32.xlu0 %v235, 64
  %v239 = vpop.permute.xlu0 %238
  %v241 = vmul.f32 %v233, %v239
  %243 = vrot.lane.b32.xlu0 %v241, 32
  %v244 = vpop.permute.xlu0 %243
  %v246 = vadd.f32 %v236, %v244
  %v247 = vtanh.pop %v246
  %249 = vrot.lane.b32.xlu0 %v247, 64
  %v250 = vpop.permute.xlu0 %249
  %v252 = vmul.f32 %v233, %v250
  %254 = vrot.lane.b32.xlu0 %v252, 32
  %v255 = vpop.permute.xlu0 %254
  %v256 = vrot.slane %v46, 2
  %v258 = vsel %vm51, %v255, 0
  %260 = vmatprep.subr.mxu0 0.0
  %261 = vmatpush1.msra.mxu0 %v47
  %262 = vmatprep.subr.mxu0 0.0
  %263 = vmatpush1.msra.mxu0 %v48
  %264 = vmatprep.subr.mxu0 0.0
  %265 = vmatpush1.msra.mxu0 %v49
  %266 = vmatprep.subr.mxu0 0.0
  %267 = vmatpush1.msra.mxu0 %v50
  %268 = vmatprep.subr.mxu0 0.0
  %269 = vmatpush1.msra.mxu0 0.0
  %270 = vmatprep.subr.mxu0 0.0
  %271 = vmatpush1.msra.mxu0 0.0
  %272 = vmatprep.subr.mxu0 0.0
  %273 = vmatpush1.msra.mxu0 0.0
  %274 = vmatprep.subr.mxu0 0.0
  %275 = vmatpush1.msra.mxu0 0.0
  %276 = vmatprep.subr.mxu0 0.0
  %277 = vmatpush1.msra.mxu0 0.0
  %278 = vmatprep.subr.mxu0 0.0
  %279 = vmatpush1.msra.mxu0 0.0
  %280 = vmatprep.subr.mxu0 0.0
  %281 = vmatpush1.msra.mxu0 0.0
  %282 = vmatprep.subr.mxu0 0.0
  %283 = vmatpush1.msra.mxu0 0.0
  %284 = vmatprep.subr.mxu0 0.0
  %285 = vmatpush1.msra.mxu0 0.0
  %286 = vmatprep.subr.mxu0 0.0
  %287 = vmatpush1.msra.mxu0 0.0
  %288 = vmatprep.subr.mxu0 0.0
  %289 = vmatpush1.msra.mxu0 0.0
  %290 = vmatprep.subr.mxu0 0.0
  %291 = vmatpush1.msra.mxu0 0.0
  %292 = vmatprep.subr.mxu0 0.0
  %293 = vmatpush1.msra.mxu0 0.0
  %294 = vmatprep.subr.mxu0 0.0
  %295 = vmatpush1.msra.mxu0 0.0
  %296 = vmatprep.subr.mxu0 0.0
  %297 = vmatpush1.msra.mxu0 0.0
  %298 = vmatprep.subr.mxu0 0.0
  %299 = vmatpush1.msra.mxu0 0.0
  %300 = vmatprep.subr.mxu0 0.0
  %301 = vmatpush1.msra.mxu0 0.0
  %302 = vmatprep.subr.mxu0 0.0
  %303 = vmatpush1.msra.mxu0 0.0
  %304 = vmatprep.subr.mxu0 0.0
  %305 = vmatpush1.msra.mxu0 0.0
  %306 = vmatprep.subr.mxu0 0.0
  %307 = vmatpush1.msra.mxu0 0.0
  %308 = vmatprep.subr.mxu0 0.0
  %309 = vmatpush1.msra.mxu0 0.0
  %310 = vmatprep.subr.mxu0 0.0
  %311 = vmatpush1.msra.mxu0 0.0
  %312 = vmatprep.subr.mxu0 0.0
  %313 = vmatpush1.msra.mxu0 0.0
  %314 = vmatprep.subr.mxu0 0.0
  %315 = vmatpush1.msra.mxu0 0.0
  %316 = vmatprep.subr.mxu0 0.0
  %317 = vmatpush1.msra.mxu0 0.0
  %318 = vmatprep.subr.mxu0 0.0
  %319 = vmatpush1.msra.mxu0 0.0
  %320 = vmatprep.subr.mxu0 0.0
  %321 = vmatpush1.msra.mxu0 0.0
  %322 = vmatprep.subr.mxu0 0.0
  %323 = vmatpush1.msra.mxu0 0.0
  %324 = vmatprep.mubr.f32.mxu0 0.0
  %325 = vmatmul.mubr.f32.gmra.mrb[0].mxu0 %v258
  %v326 = vpop.f32.mrb[0].mxu0
  %v327 = vadd.f32 %v256, %v326
  %v328 = vpop.f32.mrb[0].mxu0
  %329 = vdwg.mxu0
  %v330 = vxor.u32 %v327, 2147483648
  %v331 = vmul.f32 %v330, 1.442695
  %v332 = vpow.pop %v331
  %v333 = vadd.f32 %v332, 1.0
  %v334 = vrcp.pop %v333
  %v335 = vmul.f32 1.0, %v334
  %v336 = vmul.f32 %v335, 2.0
  %v337 = vsub.f32 %v336, 1.0
  %v338 = vmul.f32 %v335, %v246
  %340 = vrot.lane.b32.xlu0 %v337, 64
  %v341 = vpop.permute.xlu0 %340
  %v343 = vmul.f32 %v335, %v341
  %345 = vrot.lane.b32.xlu0 %v343, 32
  %v346 = vpop.permute.xlu0 %345
  %v348 = vadd.f32 %v338, %v346
  %v349 = vtanh.pop %v348
  %351 = vrot.lane.b32.xlu0 %v349, 64
  %v352 = vpop.permute.xlu0 %351
  %v354 = vmul.f32 %v335, %v352
  %356 = vrot.lane.b32.xlu0 %v354, 32
  %v357 = vpop.permute.xlu0 %356
  %v358 = vrot.slane %v46, 3
  %v360 = vsel %vm51, %v357, 0
  %362 = vmatprep.subr.mxu0 0.0
  %363 = vmatpush1.msra.mxu0 %v47
  %364 = vmatprep.subr.mxu0 0.0
  %365 = vmatpush1.msra.mxu0 %v48
  %366 = vmatprep.subr.mxu0 0.0
  %367 = vmatpush1.msra.mxu0 %v49
  %368 = vmatprep.subr.mxu0 0.0
  %369 = vmatpush1.msra.mxu0 %v50
  %370 = vmatprep.subr.mxu0 0.0
  %371 = vmatpush1.msra.mxu0 0.0
  %372 = vmatprep.subr.mxu0 0.0
  %373 = vmatpush1.msra.mxu0 0.0
  %374 = vmatprep.subr.mxu0 0.0
  %375 = vmatpush1.msra.mxu0 0.0
  %376 = vmatprep.subr.mxu0 0.0
  %377 = vmatpush1.msra.mxu0 0.0
  %378 = vmatprep.subr.mxu0 0.0
  %379 = vmatpush1.msra.mxu0 0.0
  %380 = vmatprep.subr.mxu0 0.0
  %381 = vmatpush1.msra.mxu0 0.0
  %382 = vmatprep.subr.mxu0 0.0
  %383 = vmatpush1.msra.mxu0 0.0
  %384 = vmatprep.subr.mxu0 0.0
  %385 = vmatpush1.msra.mxu0 0.0
  %386 = vmatprep.subr.mxu0 0.0
  %387 = vmatpush1.msra.mxu0 0.0
  %388 = vmatprep.subr.mxu0 0.0
  %389 = vmatpush1.msra.mxu0 0.0
  %390 = vmatprep.subr.mxu0 0.0
  %391 = vmatpush1.msra.mxu0 0.0
  %392 = vmatprep.subr.mxu0 0.0
  %393 = vmatpush1.msra.mxu0 0.0
  %394 = vmatprep.subr.mxu0 0.0
  %395 = vmatpush1.msra.mxu0 0.0
  %396 = vmatprep.subr.mxu0 0.0
  %397 = vmatpush1.msra.mxu0 0.0
  %398 = vmatprep.subr.mxu0 0.0
  %399 = vmatpush1.msra.mxu0 0.0
  %400 = vmatprep.subr.mxu0 0.0
  %401 = vmatpush1.msra.mxu0 0.0
  %402 = vmatprep.subr.mxu0 0.0
  %403 = vmatpush1.msra.mxu0 0.0
  %404 = vmatprep.subr.mxu0 0.0
  %405 = vmatpush1.msra.mxu0 0.0
  %406 = vmatprep.subr.mxu0 0.0
  %407 = vmatpush1.msra.mxu0 0.0
  %408 = vmatprep.subr.mxu0 0.0
  %409 = vmatpush1.msra.mxu0 0.0
  %410 = vmatprep.subr.mxu0 0.0
  %411 = vmatpush1.msra.mxu0 0.0
  %412 = vmatprep.subr.mxu0 0.0
  %413 = vmatpush1.msra.mxu0 0.0
  %414 = vmatprep.subr.mxu0 0.0
  %415 = vmatpush1.msra.mxu0 0.0
  %416 = vmatprep.subr.mxu0 0.0
  %417 = vmatpush1.msra.mxu0 0.0
  %418 = vmatprep.subr.mxu0 0.0
  %419 = vmatpush1.msra.mxu0 0.0
  %420 = vmatprep.subr.mxu0 0.0
  %421 = vmatpush1.msra.mxu0 0.0
  %422 = vmatprep.subr.mxu0 0.0
  %423 = vmatpush1.msra.mxu0 0.0
  %424 = vmatprep.subr.mxu0 0.0
  %425 = vmatpush1.msra.mxu0 0.0
  %426 = vmatprep.mubr.f32.mxu0 0.0
  %427 = vmatmul.mubr.f32.gmra.mrb[0].mxu0 %v360
  %v428 = vpop.f32.mrb[0].mxu0
  %v429 = vadd.f32 %v358, %v428
  %v430 = vpop.f32.mrb[0].mxu0
  %431 = vdwg.mxu0
  %v432 = vxor.u32 %v429, 2147483648
  %v433 = vmul.f32 %v432, 1.442695
  %v434 = vpow.pop %v433
  %v435 = vadd.f32 %v434, 1.0
  %v436 = vrcp.pop %v435
  %v437 = vmul.f32 1.0, %v436
  %v438 = vmul.f32 %v437, 2.0
  %v439 = vsub.f32 %v438, 1.0
  %v440 = vmul.f32 %v437, %v348
  %442 = vrot.lane.b32.xlu0 %v439, 64
  %v443 = vpop.permute.xlu0 %442
  %v445 = vmul.f32 %v437, %v443
  %447 = vrot.lane.b32.xlu0 %v445, 32
  %v448 = vpop.permute.xlu0 %447
  %v450 = vadd.f32 %v440, %v448
  %v451 = vtanh.pop %v450
  %453 = vrot.lane.b32.xlu0 %v451, 64
  %v454 = vpop.permute.xlu0 %453
  %v456 = vmul.f32 %v437, %v454
  %458 = vrot.lane.b32.xlu0 %v456, 32
  %v459 = vpop.permute.xlu0 %458
  %v460 = vrot.slane %v46, 4
  %v462 = vsel %vm51, %v459, 0
  %464 = vmatprep.subr.mxu0 0.0
  %465 = vmatpush1.msra.mxu0 %v47
  %466 = vmatprep.subr.mxu0 0.0
  %467 = vmatpush1.msra.mxu0 %v48
  %468 = vmatprep.subr.mxu0 0.0
  %469 = vmatpush1.msra.mxu0 %v49
  %470 = vmatprep.subr.mxu0 0.0
  %471 = vmatpush1.msra.mxu0 %v50
  %472 = vmatprep.subr.mxu0 0.0
  %473 = vmatpush1.msra.mxu0 0.0
  %474 = vmatprep.subr.mxu0 0.0
  %475 = vmatpush1.msra.mxu0 0.0
  %476 = vmatprep.subr.mxu0 0.0
  %477 = vmatpush1.msra.mxu0 0.0
  %478 = vmatprep.subr.mxu0 0.0
  %479 = vmatpush1.msra.mxu0 0.0
  %480 = vmatprep.subr.mxu0 0.0
  %481 = vmatpush1.msra.mxu0 0.0
  %482 = vmatprep.subr.mxu0 0.0
  %483 = vmatpush1.msra.mxu0 0.0
  %484 = vmatprep.subr.mxu0 0.0
  %485 = vmatpush1.msra.mxu0 0.0
  %486 = vmatprep.subr.mxu0 0.0
  %487 = vmatpush1.msra.mxu0 0.0
  %488 = vmatprep.subr.mxu0 0.0
  %489 = vmatpush1.msra.mxu0 0.0
  %490 = vmatprep.subr.mxu0 0.0
  %491 = vmatpush1.msra.mxu0 0.0
  %492 = vmatprep.subr.mxu0 0.0
  %493 = vmatpush1.msra.mxu0 0.0
  %494 = vmatprep.subr.mxu0 0.0
  %495 = vmatpush1.msra.mxu0 0.0
  %496 = vmatprep.subr.mxu0 0.0
  %497 = vmatpush1.msra.mxu0 0.0
  %498 = vmatprep.subr.mxu0 0.0
  %499 = vmatpush1.msra.mxu0 0.0
  %500 = vmatprep.subr.mxu0 0.0
  %501 = vmatpush1.msra.mxu0 0.0
  %502 = vmatprep.subr.mxu0 0.0
  %503 = vmatpush1.msra.mxu0 0.0
  %504 = vmatprep.subr.mxu0 0.0
  %505 = vmatpush1.msra.mxu0 0.0
  %506 = vmatprep.subr.mxu0 0.0
  %507 = vmatpush1.msra.mxu0 0.0
  %508 = vmatprep.subr.mxu0 0.0
  %509 = vmatpush1.msra.mxu0 0.0
  %510 = vmatprep.subr.mxu0 0.0
  %511 = vmatpush1.msra.mxu0 0.0
  %512 = vmatprep.subr.mxu0 0.0
  %513 = vmatpush1.msra.mxu0 0.0
  %514 = vmatprep.subr.mxu0 0.0
  %515 = vmatpush1.msra.mxu0 0.0
  %516 = vmatprep.subr.mxu0 0.0
  %517 = vmatpush1.msra.mxu0 0.0
  %518 = vmatprep.subr.mxu0 0.0
  %519 = vmatpush1.msra.mxu0 0.0
  %520 = vmatprep.subr.mxu0 0.0
  %521 = vmatpush1.msra.mxu0 0.0
  %522 = vmatprep.subr.mxu0 0.0
  %523 = vmatpush1.msra.mxu0 0.0
  %524 = vmatprep.subr.mxu0 0.0
  %525 = vmatpush1.msra.mxu0 0.0
  %526 = vmatprep.subr.mxu0 0.0
  %527 = vmatpush1.msra.mxu0 0.0
  %528 = vmatprep.mubr.f32.mxu0 0.0
  %529 = vmatmul.mubr.f32.gmra.mrb[0].mxu0 %v462
  %v530 = vpop.f32.mrb[0].mxu0
  %v531 = vadd.f32 %v460, %v530
  %v532 = vpop.f32.mrb[0].mxu0
  %533 = vdwg.mxu0
  %v534 = vxor.u32 %v531, 2147483648
  %v535 = vmul.f32 %v534, 1.442695
  %v536 = vpow.pop %v535
  %v537 = vadd.f32 %v536, 1.0
  %v538 = vrcp.pop %v537
  %v539 = vmul.f32 1.0, %v538
  %v540 = vmul.f32 %v539, 2.0
  %v541 = vsub.f32 %v540, 1.0
  %v542 = vmul.f32 %v539, %v450
  %544 = vrot.lane.b32.xlu0 %v541, 64
  %v545 = vpop.permute.xlu0 %544
  %v547 = vmul.f32 %v539, %v545
  %549 = vrot.lane.b32.xlu0 %v547, 32
  %v550 = vpop.permute.xlu0 %549
  %v552 = vadd.f32 %v542, %v550
  %v553 = vtanh.pop %v552
  %555 = vrot.lane.b32.xlu0 %v553, 64
  %v556 = vpop.permute.xlu0 %555
  %v558 = vmul.f32 %v539, %v556
  %560 = vrot.lane.b32.xlu0 %v558, 32
  %v561 = vpop.permute.xlu0 %560
  %v562 = vrot.slane %v46, 5
  %v564 = vsel %vm51, %v561, 0
  %566 = vmatprep.subr.mxu0 0.0
  %567 = vmatpush1.msra.mxu0 %v47
  %568 = vmatprep.subr.mxu0 0.0
  %569 = vmatpush1.msra.mxu0 %v48
  %570 = vmatprep.subr.mxu0 0.0
  %571 = vmatpush1.msra.mxu0 %v49
  %572 = vmatprep.subr.mxu0 0.0
  %573 = vmatpush1.msra.mxu0 %v50
  %574 = vmatprep.subr.mxu0 0.0
  %575 = vmatpush1.msra.mxu0 0.0
  %576 = vmatprep.subr.mxu0 0.0
  %577 = vmatpush1.msra.mxu0 0.0
  %578 = vmatprep.subr.mxu0 0.0
  %579 = vmatpush1.msra.mxu0 0.0
  %580 = vmatprep.subr.mxu0 0.0
  %581 = vmatpush1.msra.mxu0 0.0
  %582 = vmatprep.subr.mxu0 0.0
  %583 = vmatpush1.msra.mxu0 0.0
  %584 = vmatprep.subr.mxu0 0.0
  %585 = vmatpush1.msra.mxu0 0.0
  %586 = vmatprep.subr.mxu0 0.0
  %587 = vmatpush1.msra.mxu0 0.0
  %588 = vmatprep.subr.mxu0 0.0
  %589 = vmatpush1.msra.mxu0 0.0
  %590 = vmatprep.subr.mxu0 0.0
  %591 = vmatpush1.msra.mxu0 0.0
  %592 = vmatprep.subr.mxu0 0.0
  %593 = vmatpush1.msra.mxu0 0.0
  %594 = vmatprep.subr.mxu0 0.0
  %595 = vmatpush1.msra.mxu0 0.0
  %596 = vmatprep.subr.mxu0 0.0
  %597 = vmatpush1.msra.mxu0 0.0
  %598 = vmatprep.subr.mxu0 0.0
  %599 = vmatpush1.msra.mxu0 0.0
  %600 = vmatprep.subr.mxu0 0.0
  %601 = vmatpush1.msra.mxu0 0.0
  %602 = vmatprep.subr.mxu0 0.0
  %603 = vmatpush1.msra.mxu0 0.0
  %604 = vmatprep.subr.mxu0 0.0
  %605 = vmatpush1.msra.mxu0 0.0
  %606 = vmatprep.subr.mxu0 0.0
  %607 = vmatpush1.msra.mxu0 0.0
  %608 = vmatprep.subr.mxu0 0.0
  %609 = vmatpush1.msra.mxu0 0.0
  %610 = vmatprep.subr.mxu0 0.0
  %611 = vmatpush1.msra.mxu0 0.0
  %612 = vmatprep.subr.mxu0 0.0
  %613 = vmatpush1.msra.mxu0 0.0
  %614 = vmatprep.subr.mxu0 0.0
  %615 = vmatpush1.msra.mxu0 0.0
  %616 = vmatprep.subr.mxu0 0.0
  %617 = vmatpush1.msra.mxu0 0.0
  %618 = vmatprep.subr.mxu0 0.0
  %619 = vmatpush1.msra.mxu0 0.0
  %620 = vmatprep.subr.mxu0 0.0
  %621 = vmatpush1.msra.mxu0 0.0
  %622 = vmatprep.subr.mxu0 0.0
  %623 = vmatpush1.msra.mxu0 0.0
  %624 = vmatprep.subr.mxu0 0.0
  %625 = vmatpush1.msra.mxu0 0.0
  %626 = vmatprep.subr.mxu0 0.0
  %627 = vmatpush1.msra.mxu0 0.0
  %628 = vmatprep.subr.mxu0 0.0
  %629 = vmatpush1.msra.mxu0 0.0
  %630 = vmatprep.mubr.f32.mxu0 0.0
  %631 = vmatmul.mubr.f32.gmra.mrb[0].mxu0 %v564
  %v632 = vpop.f32.mrb[0].mxu0
  %v633 = vadd.f32 %v562, %v632
  %v634 = vpop.f32.mrb[0].mxu0
  %635 = vdwg.mxu0
  %v636 = vxor.u32 %v633, 2147483648
  %v637 = vmul.f32 %v636, 1.442695
  %v638 = vpow.pop %v637
  %v639 = vadd.f32 %v638, 1.0
  %v640 = vrcp.pop %v639
  %v641 = vmul.f32 1.0, %v640
  %v642 = vmul.f32 %v641, 2.0
  %v643 = vsub.f32 %v642, 1.0
  %v644 = vmul.f32 %v641, %v552
  %646 = vrot.lane.b32.xlu0 %v643, 64
  %v647 = vpop.permute.xlu0 %646
  %v649 = vmul.f32 %v641, %v647
  %651 = vrot.lane.b32.xlu0 %v649, 32
  %v652 = vpop.permute.xlu0 %651
  %v654 = vadd.f32 %v644, %v652
  %v655 = vtanh.pop %v654
  %657 = vrot.lane.b32.xlu0 %v655, 64
  %v658 = vpop.permute.xlu0 %657
  %v660 = vmul.f32 %v641, %v658
  %662 = vrot.lane.b32.xlu0 %v660, 32
  %v663 = vpop.permute.xlu0 %662
  %v664 = vrot.slane %v46, 6
  %v666 = vsel %vm51, %v663, 0
  %668 = vmatprep.subr.mxu0 0.0
  %669 = vmatpush1.msra.mxu0 %v47
  %670 = vmatprep.subr.mxu0 0.0
  %671 = vmatpush1.msra.mxu0 %v48
  %672 = vmatprep.subr.mxu0 0.0
  %673 = vmatpush1.msra.mxu0 %v49
  %674 = vmatprep.subr.mxu0 0.0
  %675 = vmatpush1.msra.mxu0 %v50
  %676 = vmatprep.subr.mxu0 0.0
  %677 = vmatpush1.msra.mxu0 0.0
  %678 = vmatprep.subr.mxu0 0.0
  %679 = vmatpush1.msra.mxu0 0.0
  %680 = vmatprep.subr.mxu0 0.0
  %681 = vmatpush1.msra.mxu0 0.0
  %682 = vmatprep.subr.mxu0 0.0
  %683 = vmatpush1.msra.mxu0 0.0
  %684 = vmatprep.subr.mxu0 0.0
  %685 = vmatpush1.msra.mxu0 0.0
  %686 = vmatprep.subr.mxu0 0.0
  %687 = vmatpush1.msra.mxu0 0.0
  %688 = vmatprep.subr.mxu0 0.0
  %689 = vmatpush1.msra.mxu0 0.0
  %690 = vmatprep.subr.mxu0 0.0
  %691 = vmatpush1.msra.mxu0 0.0
  %692 = vmatprep.subr.mxu0 0.0
  %693 = vmatpush1.msra.mxu0 0.0
  %694 = vmatprep.subr.mxu0 0.0
  %695 = vmatpush1.msra.mxu0 0.0
  %696 = vmatprep.subr.mxu0 0.0
  %697 = vmatpush1.msra.mxu0 0.0
  %698 = vmatprep.subr.mxu0 0.0
  %699 = vmatpush1.msra.mxu0 0.0
  %700 = vmatprep.subr.mxu0 0.0
  %701 = vmatpush1.msra.mxu0 0.0
  %702 = vmatprep.subr.mxu0 0.0
  %703 = vmatpush1.msra.mxu0 0.0
  %704 = vmatprep.subr.mxu0 0.0
  %705 = vmatpush1.msra.mxu0 0.0
  %706 = vmatprep.subr.mxu0 0.0
  %707 = vmatpush1.msra.mxu0 0.0
  %708 = vmatprep.subr.mxu0 0.0
  %709 = vmatpush1.msra.mxu0 0.0
  %710 = vmatprep.subr.mxu0 0.0
  %711 = vmatpush1.msra.mxu0 0.0
  %712 = vmatprep.subr.mxu0 0.0
  %713 = vmatpush1.msra.mxu0 0.0
  %714 = vmatprep.subr.mxu0 0.0
  %715 = vmatpush1.msra.mxu0 0.0
  %716 = vmatprep.subr.mxu0 0.0
  %717 = vmatpush1.msra.mxu0 0.0
  %718 = vmatprep.subr.mxu0 0.0
  %719 = vmatpush1.msra.mxu0 0.0
  %720 = vmatprep.subr.mxu0 0.0
  %721 = vmatpush1.msra.mxu0 0.0
  %722 = vmatprep.subr.mxu0 0.0
  %723 = vmatpush1.msra.mxu0 0.0
  %724 = vmatprep.subr.mxu0 0.0
  %725 = vmatpush1.msra.mxu0 0.0
  %726 = vmatprep.subr.mxu0 0.0
  %727 = vmatpush1.msra.mxu0 0.0
  %728 = vmatprep.subr.mxu0 0.0
  %729 = vmatpush1.msra.mxu0 0.0
  %730 = vmatprep.subr.mxu0 0.0
  %731 = vmatpush1.msra.mxu0 0.0
  %732 = vmatprep.mubr.f32.mxu0 0.0
  %733 = vmatmul.mubr.f32.gmra.mrb[0].mxu0 %v666
  %v734 = vpop.f32.mrb[0].mxu0
  %v735 = vadd.f32 %v664, %v734
  %v736 = vpop.f32.mrb[0].mxu0
  %737 = vdwg.mxu0
  %v738 = vxor.u32 %v735, 2147483648
  %v739 = vmul.f32 %v738, 1.442695
  %v740 = vpow.pop %v739
  %v741 = vadd.f32 %v740, 1.0
  %v742 = vrcp.pop %v741
  %v743 = vmul.f32 1.0, %v742
  %v744 = vmul.f32 %v743, 2.0
  %v745 = vsub.f32 %v744, 1.0
  %v746 = vmul.f32 %v743, %v654
  %748 = vrot.lane.b32.xlu0 %v745, 64
  %v749 = vpop.permute.xlu0 %748
  %v751 = vmul.f32 %v743, %v749
  %753 = vrot.lane.b32.xlu0 %v751, 32
  %v754 = vpop.permute.xlu0 %753
  %v756 = vadd.f32 %v746, %v754
  %v757 = vtanh.pop %v756
  %759 = vrot.lane.b32.xlu0 %v757, 64
  %v760 = vpop.permute.xlu0 %759
  %v762 = vmul.f32 %v743, %v760
  %764 = vrot.lane.b32.xlu0 %v762, 32
  %v765 = vpop.permute.xlu0 %764
  %v766 = vrot.slane %v46, 7
  %v768 = vsel %vm51, %v765, 0
  %770 = vmatprep.subr.mxu0 0.0
  %771 = vmatpush1.msra.mxu0 %v47
  %772 = vmatprep.subr.mxu0 0.0
  %773 = vmatpush1.msra.mxu0 %v48
  %774 = vmatprep.subr.mxu0 0.0
  %775 = vmatpush1.msra.mxu0 %v49
  %776 = vmatprep.subr.mxu0 0.0
  %777 = vmatpush1.msra.mxu0 %v50
  %778 = vmatprep.subr.mxu0 0.0
  %779 = vmatpush1.msra.mxu0 0.0
  %780 = vmatprep.subr.mxu0 0.0
  %781 = vmatpush1.msra.mxu0 0.0
  %782 = vmatprep.subr.mxu0 0.0
  %783 = vmatpush1.msra.mxu0 0.0
  %784 = vmatprep.subr.mxu0 0.0
  %785 = vmatpush1.msra.mxu0 0.0
  %786 = vmatprep.subr.mxu0 0.0
  %787 = vmatpush1.msra.mxu0 0.0
  %788 = vmatprep.subr.mxu0 0.0
  %789 = vmatpush1.msra.mxu0 0.0
  %790 = vmatprep.subr.mxu0 0.0
  %791 = vmatpush1.msra.mxu0 0.0
  %792 = vmatprep.subr.mxu0 0.0
  %793 = vmatpush1.msra.mxu0 0.0
  %794 = vmatprep.subr.mxu0 0.0
  %795 = vmatpush1.msra.mxu0 0.0
  %796 = vmatprep.subr.mxu0 0.0
  %797 = vmatpush1.msra.mxu0 0.0
  %798 = vmatprep.subr.mxu0 0.0
  %799 = vmatpush1.msra.mxu0 0.0
  %800 = vmatprep.subr.mxu0 0.0
  %801 = vmatpush1.msra.mxu0 0.0
  %802 = vmatprep.subr.mxu0 0.0
  %803 = vmatpush1.msra.mxu0 0.0
  %804 = vmatprep.subr.mxu0 0.0
  %805 = vmatpush1.msra.mxu0 0.0
  %806 = vmatprep.subr.mxu0 0.0
  %807 = vmatpush1.msra.mxu0 0.0
  %808 = vmatprep.subr.mxu0 0.0
  %809 = vmatpush1.msra.mxu0 0.0
  %810 = vmatprep.subr.mxu0 0.0
  %811 = vmatpush1.msra.mxu0 0.0
  %812 = vmatprep.subr.mxu0 0.0
  %813 = vmatpush1.msra.mxu0 0.0
  %814 = vmatprep.subr.mxu0 0.0
  %815 = vmatpush1.msra.mxu0 0.0
  %816 = vmatprep.subr.mxu0 0.0
  %817 = vmatpush1.msra.mxu0 0.0
  %818 = vmatprep.subr.mxu0 0.0
  %819 = vmatpush1.msra.mxu0 0.0
  %820 = vmatprep.subr.mxu0 0.0
  %821 = vmatpush1.msra.mxu0 0.0
  %822 = vmatprep.subr.mxu0 0.0
  %823 = vmatpush1.msra.mxu0 0.0
  %824 = vmatprep.subr.mxu0 0.0
  %825 = vmatpush1.msra.mxu0 0.0
  %826 = vmatprep.subr.mxu0 0.0
  %827 = vmatpush1.msra.mxu0 0.0
  %828 = vmatprep.subr.mxu0 0.0
  %829 = vmatpush1.msra.mxu0 0.0
  %830 = vmatprep.subr.mxu0 0.0
  %831 = vmatpush1.msra.mxu0 0.0
  %832 = vmatprep.subr.mxu0 0.0
  %833 = vmatpush1.msra.mxu0 0.0
  %834 = vmatprep.mubr.f32.mxu0 0.0
  %835 = vmatmul.mubr.f32.gmra.mrb[0].mxu0 %v768
  %v836 = vpop.f32.mrb[0].mxu0
  %v837 = vadd.f32 %v766, %v836
  %v838 = vpop.f32.mrb[0].mxu0
  %839 = vdwg.mxu0
  %v840 = vxor.u32 %v837, 2147483648
  %v841 = vmul.f32 %v840, 1.442695
  %v842 = vpow.pop %v841
  %v843 = vadd.f32 %v842, 1.0
  %v844 = vrcp.pop %v843
  %v845 = vmul.f32 1.0, %v844
  %v846 = vmul.f32 %v845, 2.0
  %v847 = vsub.f32 %v846, 1.0
  %v848 = vmul.f32 %v845, %v756
  %850 = vrot.lane.b32.xlu0 %v847, 64
  %v851 = vpop.permute.xlu0 %850
  %v853 = vmul.f32 %v845, %v851
  %855 = vrot.lane.b32.xlu0 %v853, 32
  %v856 = vpop.permute.xlu0 %855
  %v858 = vadd.f32 %v848, %v856
  %v859 = vtanh.pop %v858
  %861 = vrot.lane.b32.xlu0 %v859, 64
  %v862 = vpop.permute.xlu0 %861
  %v864 = vmul.f32 %v845, %v862
  %v865 = vrot.slane %v558, 7
  %v867 = vrot.slane %v660, 6
  %v869 = vrot.slane %v762, 5
  %v872 = vrot.slane %v864, 4
  %vm874 = vcmask 1040384
  %v875 = vsel %vm874, %v456, %v865
  %vm876 = vcmask 1041408
  %v877 = vsel %vm876, %v875, %v867
  %vm878 = vcmask 1042432
  %v879 = vsel %vm878, %v877, %v869
  %vm880 = vcmask 1043456
  %v881 = vsel %vm880, %v879, %v872
  %v882 = vld [vmem:[%s4] sm:$0xff]
  %v883 = vld [vmem:[%s4 + $0x8] sm:$0xff]
  %v884 = vld [vmem:[%s4 + $0x10] sm:$0xff]
  %v885 = vld [vmem:[%s4 + $0x18] sm:$0xff]
  %v886 = vld [vmem:[#allocation2] sm:$0x1]
  %v888 = vlaneseq
  %v889 = vshrl.u32 %v888, 7
  %v890 = vsub.s32 0, %v889
  %v891 = vrot.slane %v886, %v890
  %894 = vrot.lane.b32.xlu0 %v881, 32
  %v895 = vpop.permute.xlu0 %894
  %v896 = vsel %vm51, %v895, 0
  %898 = vmatprep.subr.mxu0 0.0
  %899 = vmatpush1.msra.mxu0 %v882
  %900 = vmatprep.subr.mxu0 0.0
  %901 = vmatpush1.msra.mxu0 %v883
  %902 = vmatprep.subr.mxu0 0.0
  %903 = vmatpush1.msra.mxu0 %v884
  %904 = vmatprep.subr.mxu0 0.0
  %905 = vmatpush1.msra.mxu0 %v885
  %906 = vmatprep.subr.mxu0 0.0
  %907 = vmatpush1.msra.mxu0 0.0
  %908 = vmatprep.subr.mxu0 0.0
  %909 = vmatpush1.msra.mxu0 0.0
  %910 = vmatprep.subr.mxu0 0.0
  %911 = vmatpush1.msra.mxu0 0.0
  %912 = vmatprep.subr.mxu0 0.0
  %913 = vmatpush1.msra.mxu0 0.0
  %914 = vmatprep.subr.mxu0 0.0
  %915 = vmatpush1.msra.mxu0 0.0
  %916 = vmatprep.subr.mxu0 0.0
  %917 = vmatpush1.msra.mxu0 0.0
  %918 = vmatprep.subr.mxu0 0.0
  %919 = vmatpush1.msra.mxu0 0.0
  %920 = vmatprep.subr.mxu0 0.0
  %921 = vmatpush1.msra.mxu0 0.0
  %922 = vmatprep.subr.mxu0 0.0
  %923 = vmatpush1.msra.mxu0 0.0
  %924 = vmatprep.subr.mxu0 0.0
  %925 = vmatpush1.msra.mxu0 0.0
  %926 = vmatprep.subr.mxu0 0.0
  %927 = vmatpush1.msra.mxu0 0.0
  %928 = vmatprep.subr.mxu0 0.0
  %929 = vmatpush1.msra.mxu0 0.0
  %930 = vmatprep.subr.mxu0 0.0
  %931 = vmatpush1.msra.mxu0 0.0
  %932 = vmatprep.subr.mxu0 0.0
  %933 = vmatpush1.msra.mxu0 0.0
  %934 = vmatprep.subr.mxu0 0.0
  %935 = vmatpush1.msra.mxu0 0.0
  %936 = vmatprep.subr.mxu0 0.0
  %937 = vmatpush1.msra.mxu0 0.0
  %938 = vmatprep.subr.mxu0 0.0
  %939 = vmatpush1.msra.mxu0 0.0
  %940 = vmatprep.subr.mxu0 0.0
  %941 = vmatpush1.msra.mxu0 0.0
  %942 = vmatprep.subr.mxu0 0.0
  %943 = vmatpush1.msra.mxu0 0.0
  %944 = vmatprep.subr.mxu0 0.0
  %945 = vmatpush1.msra.mxu0 0.0
  %946 = vmatprep.subr.mxu0 0.0
  %947 = vmatpush1.msra.mxu0 0.0
  %948 = vmatprep.subr.mxu0 0.0
  %949 = vmatpush1.msra.mxu0 0.0
  %950 = vmatprep.subr.mxu0 0.0
  %951 = vmatpush1.msra.mxu0 0.0
  %952 = vmatprep.subr.mxu0 0.0
  %953 = vmatpush1.msra.mxu0 0.0
  %954 = vmatprep.subr.mxu0 0.0
  %955 = vmatpush1.msra.mxu0 0.0
  %956 = vmatprep.subr.mxu0 0.0
  %957 = vmatpush1.msra.mxu0 0.0
  %958 = vmatprep.subr.mxu0 0.0
  %959 = vmatpush1.msra.mxu0 0.0
  %960 = vmatprep.subr.mxu0 0.0
  %961 = vmatpush1.msra.mxu0 0.0
  %962 = vmatprep.mubr.f32.mxu0 0.0
  %963 = vmatmul.mubr.f32.gmra.mrb[0].mxu0 %v896
  %v964 = vpop.f32.mrb[0].mxu0
  %v965 = vadd.f32 %v891, %v964
  %v966 = vpop.f32.mrb[0].mxu0
  %967 = vdwg.mxu0
  %vm968 = vcmask 4096
  %969 = vst.msk [vmem:[%s6] sm:$0x1f] %vm968, %v965
  // Predicated region
  $region26: #{lstm_forward.1} parent=0 // pred_check
    _
  $region27: #{lstm_forward.1} parent=0 // pred_check_branch
    %971 = sbr.rel (0) target = $region29
  $region28: #{lstm_forward.1} parent=0 // pred_region
    _
  $region29: #{lstm_forward.1} parent=0 // pred_fallthru
    _
  // Predicated region
  $region30: #{lstm_forward.1} parent=0 // pred_check
    _
  $region31: #{lstm_forward.1} parent=0 // pred_check_branch
    %973 = sbr.rel (0) target = $region33
  $region32: #{lstm_forward.1} parent=0 // pred_region
    _
  $region33: #{lstm_forward.1} parent=0 // pred_fallthru
    _

</llo_original>
